<compile_context>
chip_gen: v7x
topology: tpu7x:2x2x1
jax: 0.10.0
libtpu: 0.0.40
codegen_flags: <defaults>
</compile_context>

<pallas_src>
import functools

import numpy as np
import jax
import jax.numpy as jnp
from jax.experimental import pallas as pl
from jax.experimental.pallas import tpu as pltpu


def split_dimension(total_dim, num):
    if total_dim % num == 0:
        dims = [total_dim // num for _ in range(num)]
    else:
        dims = [total_dim // num for _ in range(num - 1)]
        dims += [total_dim - sum(dims)]
    return dims


def _round_up(x, m):
    return (x + m - 1) // m * m


# ---------------------------------------------------------------------------
# Fused product-VQ kernel: all groups, one (TILE_N, D_total) row tile per step.
# ---------------------------------------------------------------------------
def _pvq_kernel(z_ref, w_in_ref, b_in_ref, emb2_t_ref, bias_ref, wp_ref,
                b_out_ref, aux_ref,
                zq_ref, zd_ref, idx_ref, mind_ref,
                *, num_groups, codebook_size, w_pad, l2norm, mxu_dtype):
    f32 = jnp.float32
    k = codebook_size

    # ---- fused down projection (block-diag Win): (T, D) @ (D, G*cd) ----
    z = z_ref[...]                                              # (T, D) mxu dtype
    z_down = jnp.dot(z, w_in_ref[...],
                     preferred_element_type=f32) + b_in_ref[...]  # (T, G*cd) f32

    if l2norm:
        sq = z_down * z_down
        # per-lane group sum via block-diag ones matrix (broadcast within group)
        ss = jnp.dot(sq, aux_ref[...], preferred_element_type=f32)
        z_down = z_down * jax.lax.rsqrt(jnp.maximum(ss, 1e-24))

    # ---- fused distance scores: (T, G*cd) @ (G*cd, G*K_pad) block-diag ----
    # emb2_t is pre-scaled by 2, so score_lane = 2 * z.e  (+ bias when needed).
    score = jnp.dot(z_down.astype(mxu_dtype), emb2_t_ref[...],
                    preferred_element_type=f32)                 # (T, Wp) f32
    add_bias = (not l2norm) or (w_pad != num_groups * k)
    if add_bias:
        # bias = -e^2 on real lanes (l2norm=False) / 0 (l2norm=True); -1e30 on pad
        score = score + bias_ref[...]

    # ---- segmented argmax per K-lane group segment (first index on ties) ----
    lane = jax.lax.broadcasted_iota(jnp.int32, score.shape, 1)
    one_hot = jnp.zeros(score.shape, f32)
    idx_cols, max_cols = [], []
    for g in range(num_groups):
        lo = g * k
        in_g = jnp.logical_and(lane >= lo, lane < lo + k)
        s_g = jnp.where(in_g, score, -3.0e38)
        max_g = jnp.max(s_g, axis=-1, keepdims=True)            # (T, 1)
        local = lane - lo
        idx_g = jnp.min(jnp.where(s_g >= max_g, local, k),
                        axis=-1, keepdims=True)                 # (T, 1) int32
        one_hot = one_hot + jnp.where(
            jnp.logical_and(in_g, local == idx_g), 1.0, 0.0)
        idx_cols.append(idx_g)
        max_cols.append(max_g)

    idx_all = jnp.concatenate(idx_cols, axis=-1)                # (T, G) int32
    max_all = jnp.concatenate(max_cols, axis=-1)                # (T, G) f32

    # ---- fused dequantize + up-projection: one_hot @ (emb_n @ W_out) ----
    z_q = jnp.dot(one_hot.astype(mxu_dtype), wp_ref[...],
                  preferred_element_type=f32) + b_out_ref[...]  # (T, D) f32

    # ---- per-row per-group min squared distance (MSE numerator) ----
    if l2norm:
        dist = 2.0 - max_all                     # z^2 = e^2 = 1 by construction
    else:
        sq = z_down * z_down
        zsq_g = jnp.dot(sq, aux_ref[...], preferred_element_type=f32)  # (T, G)
        dist = zsq_g - max_all
    mind = jnp.maximum(dist, 0.0)

    # ---- one dense store per output per tile ----
    zq_ref[...] = z_q
    zd_ref[...] = z_down
    idx_ref[...] = idx_all
    mind_ref[...] = mind


def _pvq_pallas_call(z2d, packed, *, num_groups, codebook_size, codebook_dim,
                     d_total, w_pad, l2norm, tile_n, mxu_dtype):
    """z2d: (N_pad, D_total). Returns z_q, z_e_down, idx, min_dist (padded rows)."""
    n_pad = z2d.shape[0]
    grid = (n_pad // tile_n,)
    gcd = num_groups * codebook_dim

    kernel = functools.partial(
        _pvq_kernel, num_groups=num_groups, codebook_size=codebook_size,
        w_pad=w_pad, l2norm=l2norm, mxu_dtype=mxu_dtype)

    def row_spec(width):
        return pl.BlockSpec((tile_n, width), lambda i: (i, 0))

    def const_spec(arr):
        nd = arr.ndim
        return pl.BlockSpec(arr.shape, lambda i, _nd=nd: (0,) * _nd)

    weights = (packed["w_in"], packed["b_in"], packed["emb2_t"], packed["bias"],
               packed["wp"], packed["b_out"], packed["aux"])

    flops = 2 * n_pad * (d_total * gcd + gcd * w_pad + w_pad * d_total + gcd * gcd)
    bytes_accessed = n_pad * (d_total * z2d.dtype.itemsize
                              + (d_total + gcd + 2 * num_groups) * 4)
    cost = pl.CostEstimate(flops=int(flops),
                           transcendentals=int(n_pad * gcd) if l2norm else 0,
                           bytes_accessed=int(bytes_accessed))

    return pl.pallas_call(
        kernel,
        grid=grid,
        in_specs=[row_spec(d_total)] + [const_spec(w) for w in weights],
        out_specs=(row_spec(d_total),
                   row_spec(gcd),
                   row_spec(num_groups),
                   row_spec(num_groups)),
        out_shape=(
            jax.ShapeDtypeStruct((n_pad, d_total), jnp.float32),
            jax.ShapeDtypeStruct((n_pad, gcd), jnp.float32),
            jax.ShapeDtypeStruct((n_pad, num_groups), jnp.int32),
            jax.ShapeDtypeStruct((n_pad, num_groups), jnp.float32),
        ),
        compiler_params=pltpu.CompilerParams(
            dimension_semantics=("parallel",),
            vmem_limit_bytes=48 * 1024 * 1024,
        ),
        cost_estimate=cost,
    )(z2d, *weights)


# ---------------------------------------------------------------------------
# Product VQ module (parameters initialized deterministically in-script).
# ---------------------------------------------------------------------------
class ProductVectorQuantizePallas:
    def __init__(self, in_dim, in_freq, overlap=4, num_vqs=4, codebook_dim=8,
                 codebook_size=64, l2norm=True, seed=0, row_tile=1024,
                 mxu_dtype=jnp.bfloat16):
        self.in_dim, self.in_freq = in_dim, in_freq
        self.overlap, self.num_vqs = overlap, num_vqs
        self.codebook_dim, self.codebook_size = codebook_dim, codebook_size
        self.l2norm = l2norm
        self.row_tile = row_tile
        self.mxu_dtype = mxu_dtype
        self.fix_dim = in_freq * in_dim
        self.vq_dims = split_dimension(self.fix_dim * overlap, num_vqs)

        key = jax.random.PRNGKey(seed)
        self.params = []
        for d in self.vq_dims:
            key, k1, k2, k3, k4, k5 = jax.random.split(key, 6)
            lim_in = 1.0 / (d ** 0.5)
            lim_out = 1.0 / (codebook_dim ** 0.5)
            self.params.append(dict(
                w_in=jax.random.uniform(k1, (d, codebook_dim), jnp.float32,
                                        -lim_in, lim_in),
                b_in=jax.random.uniform(k2, (1, codebook_dim), jnp.float32,
                                        -lim_in, lim_in),
                w_out=jax.random.uniform(k3, (codebook_dim, d), jnp.float32,
                                         -lim_out, lim_out),
                b_out=jax.random.uniform(k4, (1, d), jnp.float32,
                                         -lim_out, lim_out),
                emb=jax.random.normal(k5, (codebook_size, codebook_dim),
                                      jnp.float32),
            ))
        self._build_packed()

    def _build_packed(self):
        """Build block-diagonal fused weights once (host-side, at init)."""
        cd, k, g_all = self.codebook_dim, self.codebook_size, self.num_vqs
        d_total = sum(self.vq_dims)
        gcd = g_all * cd
        w = g_all * k
        w_pad = _round_up(max(w, 128), 128)      # lane-dense fused codebook axis
        self.d_total, self.w_pad = d_total, w_pad

        w_in = np.zeros((d_total, gcd), np.float32)
        b_in = np.zeros((1, gcd), np.float32)
        emb2_t = np.zeros((gcd, w_pad), np.float32)
        bias = np.full((1, w_pad), -1e30, np.float32)     # pad lanes never win
        wp = np.zeros((w_pad, d_total), np.float32)
        b_out = np.zeros((1, d_total), np.float32)
        if self.l2norm:
            aux = np.zeros((gcd, gcd), np.float32)        # block-diag ones (seg sum)
        else:
            aux = np.zeros((gcd, g_all), np.float32)      # group selector

        off = 0
        for g, d in enumerate(self.vq_dims):
            p = {n: np.asarray(v) for n, v in self.params[g].items()}
            emb = p["emb"]
            if self.l2norm:
                nrm = np.sqrt(np.sum(emb * emb, axis=-1, keepdims=True))
                emb = emb / np.maximum(nrm, 1e-12)
            w_in[off:off + d, g * cd:(g + 1) * cd] = p["w_in"]
            b_in[:, g * cd:(g + 1) * cd] = p["b_in"]
            emb2_t[g * cd:(g + 1) * cd, g * k:(g + 1) * k] = 2.0 * emb.T
            bias[:, g * k:(g + 1) * k] = (
                0.0 if self.l2norm else -np.sum(emb * emb, axis=-1))
            # W' = emb_n @ W_out  (dequantize + up-projection fused)
            wp[g * k:(g + 1) * k, off:off + d] = emb @ p["w_out"]
            b_out[:, off:off + d] = p["b_out"]
            if self.l2norm:
                aux[g * cd:(g + 1) * cd, g * cd:(g + 1) * cd] = 1.0
            else:
                aux[g * cd:(g + 1) * cd, g] = 1.0
            off += d

        md = self.mxu_dtype
        self.packed = dict(
            w_in=jnp.asarray(w_in, md),        # (D, G*cd)    bf16 MXU operand
            b_in=jnp.asarray(b_in),            # (1, G*cd)    f32
            emb2_t=jnp.asarray(emb2_t, md),    # (G*cd, Wp)   bf16 MXU operand
            bias=jnp.asarray(bias),            # (1, Wp)      f32
            wp=jnp.asarray(wp, md),            # (Wp, D)      bf16 MXU operand
            b_out=jnp.asarray(b_out),          # (1, D)       f32
            aux=jnp.asarray(aux),              # f32 (exact 0/1)
        )

    # rearrange 'b (h w) c -> b w (c h)' then fold `overlap` steps together
    def pre_process(self, z_e):
        b, hw, c = z_e.shape
        h = self.in_freq
        w = hw // h
        z = z_e.reshape(b, h, w, c)                 # (B, H, W, C)
        z = jnp.transpose(z, (0, 2, 3, 1))          # (B, W, C, H)
        z = z.reshape(b, w, c * h)                  # (B, W, fix_dim)
        if self.overlap > 1:
            assert w % self.overlap == 0, "Time dimension must be multiple of overlap"
            z = z.reshape(b, w // self.overlap, self.overlap * self.fix_dim)
        return z

    # inverse of pre_process
    def post_process(self, z_q):
        b = z_q.shape[0]
        if self.overlap > 1:
            z_q = z_q.reshape(b, -1, self.fix_dim)  # (B, W, fix_dim)
        w = z_q.shape[1]
        h, c = self.in_freq, self.in_dim
        z = z_q.reshape(b, w, c, h)                 # (B, W, C, H)
        z = jnp.transpose(z, (0, 3, 1, 2))          # (B, H, W, C)
        return z.reshape(b, h * w, c)               # (B, H*W, C)

    def __call__(self, z_e, freeze=False):
        b = z_e.shape[0]
        z = self.pre_process(z_e)                   # (B, T, overlap*fix_dim)
        t = z.shape[1]
        n = b * t
        # bf16 at the pallas_call boundary (halves HBM read + MXU passes);
        # all accumulation / argmin / loss math stays f32 inside the kernel.
        z2 = z.reshape(n, self.d_total).astype(self.mxu_dtype)

        tile_n = self.row_tile if n >= self.row_tile else _round_up(n, 8)
        n_pad = _round_up(n, tile_n)
        if n_pad != n:
            z2 = jnp.pad(z2, ((0, n_pad - n), (0, 0)))

        z_q2, z_down, idx, mind = _pvq_pallas_call(
            z2, self.packed, num_groups=self.num_vqs,
            codebook_size=self.codebook_size, codebook_dim=self.codebook_dim,
            d_total=self.d_total, w_pad=self.w_pad, l2norm=self.l2norm,
            tile_n=tile_n, mxu_dtype=self.mxu_dtype)

        z_q = self.post_process(z_q2[:n].reshape(b, t, self.d_total))     # (B,H*W,C)
        z_e_downs = z_down[:n].reshape(b, t, self.num_vqs, self.codebook_dim)
        z_e_downs = jnp.transpose(z_e_downs, (0, 2, 1, 3))                # (B,G,T,cd)
        indices = jnp.transpose(idx[:n].reshape(b, t, self.num_vqs),
                                (0, 2, 1))                                # (B,G,T)

        # sum_g MSE_g / G  ==  sum(min_dist) / (N * cd * G)
        total_sq = jnp.sum(mind[:n])
        commitment_loss = total_sq / jnp.float32(n * self.codebook_dim * self.num_vqs)
        codebook_loss = jnp.float32(0.0) if freeze else commitment_loss
        return (z_q, z_e_downs, indices), (commitment_loss, codebook_loss)


if __name__ == "__main__":
    # small deterministic config: C=in_dim=4, H=in_freq=8, W=16, overlap=4
    B, C, H, W = 2, 4, 8, 16
    pvq = ProductVectorQuantizePallas(in_dim=C, in_freq=H, overlap=4,
                                      num_vqs=4, codebook_dim=8,
                                      codebook_size=64, l2norm=True, seed=0)

    key = jax.random.PRNGKey(0)
    z_e = jax.random.normal(key, (B, H * W, C), dtype=jnp.float32)

    (z_q, z_e_downs, indices), (cm_loss, cb_loss) = pvq(z_e)
    jax.block_until_ready((z_q, z_e_downs, indices, cm_loss, cb_loss))

    T = W // pvq.overlap
    assert z_q.shape == (B, H * W, C)
    assert z_e_downs.shape == (B, pvq.num_vqs, T, pvq.codebook_dim)
    assert indices.shape == (B, pvq.num_vqs, T)
    assert bool(jnp.all(jnp.isfinite(z_q)))
    assert bool(jnp.all(jnp.isfinite(z_e_downs)))
    assert bool(jnp.all((indices >= 0) & (indices < pvq.codebook_size)))
    assert bool(jnp.isfinite(cm_loss)) and bool(jnp.isfinite(cb_loss))
    print("KERNEL_OK")
</pallas_src>

<mosaic_0001>
module attributes {stable_mosaic.version = 11 : i64} {
  func.func @_pvq_kernel(%arg0: i32, %arg1: memref<8x128xbf16, #tpu.memory_space<vmem>>, %arg2: memref<128x32xbf16, #tpu.memory_space<vmem>>, %arg3: memref<1x32xf32, #tpu.memory_space<vmem>>, %arg4: memref<32x256xbf16, #tpu.memory_space<vmem>>, %arg5: memref<1x256xf32, #tpu.memory_space<vmem>>, %arg6: memref<256x128xbf16, #tpu.memory_space<vmem>>, %arg7: memref<1x128xf32, #tpu.memory_space<vmem>>, %arg8: memref<32x32xf32, #tpu.memory_space<vmem>>, %arg9: memref<8x128xf32, #tpu.memory_space<vmem>>, %arg10: memref<8x32xf32, #tpu.memory_space<vmem>>, %arg11: memref<8x4xi32, #tpu.memory_space<vmem>>, %arg12: memref<8x4xf32, #tpu.memory_space<vmem>>) attributes {dimension_semantics = [#tpu.dimension_semantics<parallel>], iteration_bounds = array<i64: 1>, scalar_prefetch = 0 : i64, scratch_operands = 0 : i64, tpu.core_type = #tpu.core_type<tc>, window_params = [{transform_indices = @transform_0, window_bounds = array<i64: 8, 128>}, {pipeline_mode = #tpu.pipeline_mode<synchronous>, transform_indices = @transform_1, window_bounds = array<i64: 128, 32>}, {pipeline_mode = #tpu.pipeline_mode<synchronous>, transform_indices = @transform_2, window_bounds = array<i64: 1, 32>}, {pipeline_mode = #tpu.pipeline_mode<synchronous>, transform_indices = @transform_3, window_bounds = array<i64: 32, 256>}, {pipeline_mode = #tpu.pipeline_mode<synchronous>, transform_indices = @transform_4, window_bounds = array<i64: 1, 256>}, {pipeline_mode = #tpu.pipeline_mode<synchronous>, transform_indices = @transform_5, window_bounds = array<i64: 256, 128>}, {pipeline_mode = #tpu.pipeline_mode<synchronous>, transform_indices = @transform_6, window_bounds = array<i64: 1, 128>}, {pipeline_mode = #tpu.pipeline_mode<synchronous>, transform_indices = @transform_7, window_bounds = array<i64: 32, 32>}, {transform_indices = @transform_8, window_bounds = array<i64: 8, 128>}, {transform_indices = @transform_9, window_bounds = array<i64: 8, 32>}, {transform_indices = @transform_10, window_bounds = array<i64: 8, 4>}, {transform_indices = @transform_11, window_bounds = array<i64: 8, 4>}]} {
    %c0 = arith.constant 0 : index
    %c0_0 = arith.constant 0 : index
    %0 = vector.load %arg1[%c0, %c0_0] : memref<8x128xbf16, #tpu.memory_space<vmem>>, vector<8x128xbf16>
    %c0_1 = arith.constant 0 : index
    %c0_2 = arith.constant 0 : index
    %1 = vector.load %arg2[%c0_1, %c0_2] : memref<128x32xbf16, #tpu.memory_space<vmem>>, vector<128x32xbf16>
    %cst = arith.constant dense<0.000000e+00> : vector<8x32xf32>
    %2 = tpu.matmul %0, %1, %cst {dimension_numbers = #tpu.dot_dimension_numbers<[1], [0], [0], [1], [0, 0, 1, 1], [], []>} : vector<8x128xbf16>, vector<128x32xbf16>, vector<8x32xf32> -> vector<8x32xf32>
    %c0_3 = arith.constant 0 : index
    %c0_4 = arith.constant 0 : index
    %3 = vector.load %arg3[%c0_3, %c0_4] : memref<1x32xf32, #tpu.memory_space<vmem>>, vector<1x32xf32>
    %4 = vector.broadcast %3 : vector<1x32xf32> to vector<8x32xf32>
    %5 = arith.addf %2, %4 : vector<8x32xf32>
    %6 = arith.mulf %5, %5 : vector<8x32xf32>
    %c0_5 = arith.constant 0 : index
    %c0_6 = arith.constant 0 : index
    %7 = vector.load %arg8[%c0_5, %c0_6] : memref<32x32xf32, #tpu.memory_space<vmem>>, vector<32x32xf32>
    %cst_7 = arith.constant dense<0.000000e+00> : vector<8x32xf32>
    %8 = tpu.matmul %6, %7, %cst_7 {dimension_numbers = #tpu.dot_dimension_numbers<[1], [0], [0], [1], [0, 0, 1, 1], [], []>} : vector<8x32xf32>, vector<32x32xf32>, vector<8x32xf32> -> vector<8x32xf32>
    %cst_8 = arith.constant 1.000000e-24 : f32
    %9 = vector.broadcast %cst_8 : f32 to vector<8x32xf32>
    %10 = arith.maximumf %8, %9 : vector<8x32xf32>
    %11 = math.rsqrt %10 : vector<8x32xf32>
    %12 = arith.mulf %5, %11 : vector<8x32xf32>
    %13 = arith.truncf %12 : vector<8x32xf32> to vector<8x32xbf16>
    %c0_9 = arith.constant 0 : index
    %c0_10 = arith.constant 0 : index
    %14 = vector.load %arg4[%c0_9, %c0_10] : memref<32x256xbf16, #tpu.memory_space<vmem>>, vector<32x256xbf16>
    %cst_11 = arith.constant dense<0.000000e+00> : vector<8x256xf32>
    %15 = tpu.matmul %13, %14, %cst_11 {dimension_numbers = #tpu.dot_dimension_numbers<[1], [0], [0], [1], [0, 0, 1, 1], [], []>} : vector<8x32xbf16>, vector<32x256xbf16>, vector<8x256xf32> -> vector<8x256xf32>
    %16 = tpu.iota {dimensions = array<i32: 1>} : vector<8x256xi32>
    %cst_12 = arith.constant 0.000000e+00 : f32
    %17 = vector.broadcast %cst_12 : f32 to vector<8x256xf32>
    %c0_i32 = arith.constant 0 : i32
    %18 = vector.broadcast %c0_i32 : i32 to vector<8x256xi32>
    %19 = arith.cmpi sge, %16, %18 : vector<8x256xi32>
    %c64_i32 = arith.constant 64 : i32
    %20 = vector.broadcast %c64_i32 : i32 to vector<8x256xi32>
    %21 = arith.cmpi slt, %16, %20 : vector<8x256xi32>
    %22 = arith.andi %19, %21 : vector<8x256xi1>
    %cst_13 = arith.constant -3.000000e+38 : f32
    %23 = vector.broadcast %cst_13 : f32 to vector<8x256xf32>
    %24 = arith.select %22, %15, %23 : vector<8x256xi1>, vector<8x256xf32>
    %cst_14 = arith.constant dense<0xFF800000> : vector<8xf32>
    %25 = vector.multi_reduction <maximumf>, %24, %cst_14 [1] : vector<8x256xf32> to vector<8xf32>
    %26 = vector.shape_cast %25 : vector<8xf32> to vector<8x1xf32>
    %c0_i32_15 = arith.constant 0 : i32
    %27 = vector.broadcast %c0_i32_15 : i32 to vector<8x256xi32>
    %28 = arith.subi %16, %27 : vector<8x256xi32>
    %29 = vector.broadcast %26 : vector<8x1xf32> to vector<8x256xf32>
    %30 = arith.cmpf oge, %24, %29 : vector<8x256xf32>
    %c64_i32_16 = arith.constant 64 : i32
    %31 = vector.broadcast %c64_i32_16 : i32 to vector<8x256xi32>
    %32 = arith.select %30, %28, %31 : vector<8x256xi1>, vector<8x256xi32>
    %cst_17 = arith.constant dense<2147483647> : vector<8xi32>
    %33 = vector.multi_reduction <minsi>, %32, %cst_17 [1] : vector<8x256xi32> to vector<8xi32>
    %34 = vector.shape_cast %33 : vector<8xi32> to vector<8x1xi32>
    %35 = vector.broadcast %34 : vector<8x1xi32> to vector<8x256xi32>
    %36 = arith.cmpi eq, %28, %35 : vector<8x256xi32>
    %37 = arith.andi %22, %36 : vector<8x256xi1>
    %cst_18 = arith.constant 1.000000e+00 : f32
    %cst_19 = arith.constant 0.000000e+00 : f32
    %38 = vector.broadcast %cst_18 : f32 to vector<8x256xf32>
    %39 = vector.broadcast %cst_19 : f32 to vector<8x256xf32>
    %40 = arith.select %37, %38, %39 : vector<8x256xi1>, vector<8x256xf32>
    %41 = arith.addf %17, %40 : vector<8x256xf32>
    %c64_i32_20 = arith.constant 64 : i32
    %42 = vector.broadcast %c64_i32_20 : i32 to vector<8x256xi32>
    %43 = arith.cmpi sge, %16, %42 : vector<8x256xi32>
    %c128_i32 = arith.constant 128 : i32
    %44 = vector.broadcast %c128_i32 : i32 to vector<8x256xi32>
    %45 = arith.cmpi slt, %16, %44 : vector<8x256xi32>
    %46 = arith.andi %43, %45 : vector<8x256xi1>
    %cst_21 = arith.constant -3.000000e+38 : f32
    %47 = vector.broadcast %cst_21 : f32 to vector<8x256xf32>
    %48 = arith.select %46, %15, %47 : vector<8x256xi1>, vector<8x256xf32>
    %cst_22 = arith.constant dense<0xFF800000> : vector<8xf32>
    %49 = vector.multi_reduction <maximumf>, %48, %cst_22 [1] : vector<8x256xf32> to vector<8xf32>
    %50 = vector.shape_cast %49 : vector<8xf32> to vector<8x1xf32>
    %c64_i32_23 = arith.constant 64 : i32
    %51 = vector.broadcast %c64_i32_23 : i32 to vector<8x256xi32>
    %52 = arith.subi %16, %51 : vector<8x256xi32>
    %53 = vector.broadcast %50 : vector<8x1xf32> to vector<8x256xf32>
    %54 = arith.cmpf oge, %48, %53 : vector<8x256xf32>
    %c64_i32_24 = arith.constant 64 : i32
    %55 = vector.broadcast %c64_i32_24 : i32 to vector<8x256xi32>
    %56 = arith.select %54, %52, %55 : vector<8x256xi1>, vector<8x256xi32>
    %cst_25 = arith.constant dense<2147483647> : vector<8xi32>
    %57 = vector.multi_reduction <minsi>, %56, %cst_25 [1] : vector<8x256xi32> to vector<8xi32>
    %58 = vector.shape_cast %57 : vector<8xi32> to vector<8x1xi32>
    %59 = vector.broadcast %58 : vector<8x1xi32> to vector<8x256xi32>
    %60 = arith.cmpi eq, %52, %59 : vector<8x256xi32>
    %61 = arith.andi %46, %60 : vector<8x256xi1>
    %cst_26 = arith.constant 1.000000e+00 : f32
    %cst_27 = arith.constant 0.000000e+00 : f32
    %62 = vector.broadcast %cst_26 : f32 to vector<8x256xf32>
    %63 = vector.broadcast %cst_27 : f32 to vector<8x256xf32>
    %64 = arith.select %61, %62, %63 : vector<8x256xi1>, vector<8x256xf32>
    %65 = arith.addf %41, %64 : vector<8x256xf32>
    %c128_i32_28 = arith.constant 128 : i32
    %66 = vector.broadcast %c128_i32_28 : i32 to vector<8x256xi32>
    %67 = arith.cmpi sge, %16, %66 : vector<8x256xi32>
    %c192_i32 = arith.constant 192 : i32
    %68 = vector.broadcast %c192_i32 : i32 to vector<8x256xi32>
    %69 = arith.cmpi slt, %16, %68 : vector<8x256xi32>
    %70 = arith.andi %67, %69 : vector<8x256xi1>
    %cst_29 = arith.constant -3.000000e+38 : f32
    %71 = vector.broadcast %cst_29 : f32 to vector<8x256xf32>
    %72 = arith.select %70, %15, %71 : vector<8x256xi1>, vector<8x256xf32>
    %cst_30 = arith.constant dense<0xFF800000> : vector<8xf32>
    %73 = vector.multi_reduction <maximumf>, %72, %cst_30 [1] : vector<8x256xf32> to vector<8xf32>
    %74 = vector.shape_cast %73 : vector<8xf32> to vector<8x1xf32>
    %c128_i32_31 = arith.constant 128 : i32
    %75 = vector.broadcast %c128_i32_31 : i32 to vector<8x256xi32>
    %76 = arith.subi %16, %75 : vector<8x256xi32>
    %77 = vector.broadcast %74 : vector<8x1xf32> to vector<8x256xf32>
    %78 = arith.cmpf oge, %72, %77 : vector<8x256xf32>
    %c64_i32_32 = arith.constant 64 : i32
    %79 = vector.broadcast %c64_i32_32 : i32 to vector<8x256xi32>
    %80 = arith.select %78, %76, %79 : vector<8x256xi1>, vector<8x256xi32>
    %cst_33 = arith.constant dense<2147483647> : vector<8xi32>
    %81 = vector.multi_reduction <minsi>, %80, %cst_33 [1] : vector<8x256xi32> to vector<8xi32>
    %82 = vector.shape_cast %81 : vector<8xi32> to vector<8x1xi32>
    %83 = vector.broadcast %82 : vector<8x1xi32> to vector<8x256xi32>
    %84 = arith.cmpi eq, %76, %83 : vector<8x256xi32>
    %85 = arith.andi %70, %84 : vector<8x256xi1>
    %cst_34 = arith.constant 1.000000e+00 : f32
    %cst_35 = arith.constant 0.000000e+00 : f32
    %86 = vector.broadcast %cst_34 : f32 to vector<8x256xf32>
    %87 = vector.broadcast %cst_35 : f32 to vector<8x256xf32>
    %88 = arith.select %85, %86, %87 : vector<8x256xi1>, vector<8x256xf32>
    %89 = arith.addf %65, %88 : vector<8x256xf32>
    %c192_i32_36 = arith.constant 192 : i32
    %90 = vector.broadcast %c192_i32_36 : i32 to vector<8x256xi32>
    %91 = arith.cmpi sge, %16, %90 : vector<8x256xi32>
    %c256_i32 = arith.constant 256 : i32
    %92 = vector.broadcast %c256_i32 : i32 to vector<8x256xi32>
    %93 = arith.cmpi slt, %16, %92 : vector<8x256xi32>
    %94 = arith.andi %91, %93 : vector<8x256xi1>
    %cst_37 = arith.constant -3.000000e+38 : f32
    %95 = vector.broadcast %cst_37 : f32 to vector<8x256xf32>
    %96 = arith.select %94, %15, %95 : vector<8x256xi1>, vector<8x256xf32>
    %cst_38 = arith.constant dense<0xFF800000> : vector<8xf32>
    %97 = vector.multi_reduction <maximumf>, %96, %cst_38 [1] : vector<8x256xf32> to vector<8xf32>
    %98 = vector.shape_cast %97 : vector<8xf32> to vector<8x1xf32>
    %c192_i32_39 = arith.constant 192 : i32
    %99 = vector.broadcast %c192_i32_39 : i32 to vector<8x256xi32>
    %100 = arith.subi %16, %99 : vector<8x256xi32>
    %101 = vector.broadcast %98 : vector<8x1xf32> to vector<8x256xf32>
    %102 = arith.cmpf oge, %96, %101 : vector<8x256xf32>
    %c64_i32_40 = arith.constant 64 : i32
    %103 = vector.broadcast %c64_i32_40 : i32 to vector<8x256xi32>
    %104 = arith.select %102, %100, %103 : vector<8x256xi1>, vector<8x256xi32>
    %cst_41 = arith.constant dense<2147483647> : vector<8xi32>
    %105 = vector.multi_reduction <minsi>, %104, %cst_41 [1] : vector<8x256xi32> to vector<8xi32>
    %106 = vector.shape_cast %105 : vector<8xi32> to vector<8x1xi32>
    %107 = vector.broadcast %106 : vector<8x1xi32> to vector<8x256xi32>
    %108 = arith.cmpi eq, %100, %107 : vector<8x256xi32>
    %109 = arith.andi %94, %108 : vector<8x256xi1>
    %cst_42 = arith.constant 1.000000e+00 : f32
    %cst_43 = arith.constant 0.000000e+00 : f32
    %110 = vector.broadcast %cst_42 : f32 to vector<8x256xf32>
    %111 = vector.broadcast %cst_43 : f32 to vector<8x256xf32>
    %112 = arith.select %109, %110, %111 : vector<8x256xi1>, vector<8x256xf32>
    %113 = arith.addf %89, %112 : vector<8x256xf32>
    %114 = tpu.concatenate %34, %58, %82, %106 in 1 : vector<8x1xi32>, vector<8x1xi32>, vector<8x1xi32>, vector<8x1xi32> -> vector<8x4xi32>
    %115 = tpu.concatenate %26, %50, %74, %98 in 1 : vector<8x1xf32>, vector<8x1xf32>, vector<8x1xf32>, vector<8x1xf32> -> vector<8x4xf32>
    %116 = arith.truncf %113 : vector<8x256xf32> to vector<8x256xbf16>
    %c0_44 = arith.constant 0 : index
    %c0_45 = arith.constant 0 : index
    %117 = vector.load %arg6[%c0_44, %c0_45] : memref<256x128xbf16, #tpu.memory_space<vmem>>, vector<256x128xbf16>
    %cst_46 = arith.constant dense<0.000000e+00> : vector<8x128xf32>
    %118 = tpu.matmul %116, %117, %cst_46 {dimension_numbers = #tpu.dot_dimension_numbers<[1], [0], [0], [1], [0, 0, 1, 1], [], []>} : vector<8x256xbf16>, vector<256x128xbf16>, vector<8x128xf32> -> vector<8x128xf32>
    %c0_47 = arith.constant 0 : index
    %c0_48 = arith.constant 0 : index
    %119 = vector.load %arg7[%c0_47, %c0_48] : memref<1x128xf32, #tpu.memory_space<vmem>>, vector<1x128xf32>
    %120 = vector.broadcast %119 : vector<1x128xf32> to vector<8x128xf32>
    %121 = arith.addf %118, %120 : vector<8x128xf32>
    %cst_49 = arith.constant 2.000000e+00 : f32
    %122 = vector.broadcast %cst_49 : f32 to vector<8x4xf32>
    %123 = arith.subf %122, %115 : vector<8x4xf32>
    %cst_50 = arith.constant 0.000000e+00 : f32
    %124 = vector.broadcast %cst_50 : f32 to vector<8x4xf32>
    %125 = arith.maximumf %123, %124 : vector<8x4xf32>
    %c0_51 = arith.constant 0 : index
    %c0_52 = arith.constant 0 : index
    %126 = vector.load %arg9[%c0_51, %c0_52] : memref<8x128xf32, #tpu.memory_space<vmem>>, vector<8x128xf32>
    tpu.vector_store %arg9[%c0_51, %c0_52], %121 {strides = array<i32>} : memref<8x128xf32, #tpu.memory_space<vmem>>, vector<8x128xf32>,
    %c0_53 = arith.constant 0 : index
    %c0_54 = arith.constant 0 : index
    %127 = vector.load %arg10[%c0_53, %c0_54] : memref<8x32xf32, #tpu.memory_space<vmem>>, vector<8x32xf32>
    tpu.vector_store %arg10[%c0_53, %c0_54], %12 {strides = array<i32>} : memref<8x32xf32, #tpu.memory_space<vmem>>, vector<8x32xf32>,
    %c0_55 = arith.constant 0 : index
    %c0_56 = arith.constant 0 : index
    %128 = vector.load %arg11[%c0_55, %c0_56] : memref<8x4xi32, #tpu.memory_space<vmem>>, vector<8x4xi32>
    tpu.vector_store %arg11[%c0_55, %c0_56], %114 {strides = array<i32>} : memref<8x4xi32, #tpu.memory_space<vmem>>, vector<8x4xi32>,
    %c0_57 = arith.constant 0 : index
    %c0_58 = arith.constant 0 : index
    %129 = vector.load %arg12[%c0_57, %c0_58] : memref<8x4xf32, #tpu.memory_space<vmem>>, vector<8x4xf32>
    tpu.vector_store %arg12[%c0_57, %c0_58], %125 {strides = array<i32>} : memref<8x4xf32, #tpu.memory_space<vmem>>, vector<8x4xf32>,
    return
  }
  func.func @transform_0(%arg0: i32) -> (i32, i32) {
    %c0_i32 = arith.constant 0 : i32
    %c0_i32_0 = arith.constant 0 : i32
    return %arg0, %c0_i32 : i32, i32
  }
  func.func @transform_1(%arg0: i32) -> (i32, i32) {
    %c0_i32 = arith.constant 0 : i32
    %c0_i32_0 = arith.constant 0 : i32
    %c0_i32_1 = arith.constant 0 : i32
    return %c0_i32, %c0_i32_0 : i32, i32
  }
  func.func @transform_2(%arg0: i32) -> (i32, i32) {
    %c0_i32 = arith.constant 0 : i32
    %c0_i32_0 = arith.constant 0 : i32
    %c0_i32_1 = arith.constant 0 : i32
    return %c0_i32, %c0_i32_0 : i32, i32
  }
  func.func @transform_3(%arg0: i32) -> (i32, i32) {
    %c0_i32 = arith.constant 0 : i32
    %c0_i32_0 = arith.constant 0 : i32
    %c0_i32_1 = arith.constant 0 : i32
    return %c0_i32, %c0_i32_0 : i32, i32
  }
  func.func @transform_4(%arg0: i32) -> (i32, i32) {
    %c0_i32 = arith.constant 0 : i32
    %c0_i32_0 = arith.constant 0 : i32
    %c0_i32_1 = arith.constant 0 : i32
    return %c0_i32, %c0_i32_0 : i32, i32
  }
  func.func @transform_5(%arg0: i32) -> (i32, i32) {
    %c0_i32 = arith.constant 0 : i32
    %c0_i32_0 = arith.constant 0 : i32
    %c0_i32_1 = arith.constant 0 : i32
    return %c0_i32, %c0_i32_0 : i32, i32
  }
  func.func @transform_6(%arg0: i32) -> (i32, i32) {
    %c0_i32 = arith.constant 0 : i32
    %c0_i32_0 = arith.constant 0 : i32
    %c0_i32_1 = arith.constant 0 : i32
    return %c0_i32, %c0_i32_0 : i32, i32
  }
  func.func @transform_7(%arg0: i32) -> (i32, i32) {
    %c0_i32 = arith.constant 0 : i32
    %c0_i32_0 = arith.constant 0 : i32
    %c0_i32_1 = arith.constant 0 : i32
    return %c0_i32, %c0_i32_0 : i32, i32
  }
  func.func @transform_8(%arg0: i32) -> (i32, i32) {
    %c0_i32 = arith.constant 0 : i32
    %c0_i32_0 = arith.constant 0 : i32
    return %arg0, %c0_i32 : i32, i32
  }
  func.func @transform_9(%arg0: i32) -> (i32, i32) {
    %c0_i32 = arith.constant 0 : i32
    %c0_i32_0 = arith.constant 0 : i32
    return %arg0, %c0_i32 : i32, i32
  }
  func.func @transform_10(%arg0: i32) -> (i32, i32) {
    %c0_i32 = arith.constant 0 : i32
    %c0_i32_0 = arith.constant 0 : i32
    return %arg0, %c0_i32 : i32, i32
  }
  func.func @transform_11(%arg0: i32) -> (i32, i32) {
    %c0_i32 = arith.constant 0 : i32
    %c0_i32_0 = arith.constant 0 : i32
    return %arg0, %c0_i32 : i32, i32
  }
}

</mosaic_0001>

<llo_original>
// kernel: tpu_custom_call.1
$region0: #{tpu_custom_call.1}
  #allocation0 [shape = 'u32[]', space=smem, size = 0x4, offset = 0x4, fixed_abs, tag = 'smem constant byte address 0x4 - core index']
  #allocation1 [shape = 'u32[144,128]{1,0:T(1,128)}', space=vmem, size = 0x12000, scoped, tag = 'internal scratch']
  %s0 = inlined_call_operand.vmem [shape: bf16[8,128], index: 0, kind: input, shape index: {}]
  %s1 = inlined_call_operand.vmem [shape: bf16[128,32], index: 1, kind: input, shape index: {}]
  %s2 = inlined_call_operand.vmem [shape: f32[1,32], index: 2, kind: input, shape index: {}]
  %s3 = inlined_call_operand.vmem [shape: bf16[32,256], index: 3, kind: input, shape index: {}]
  %s4 = inlined_call_operand.vmem [shape: f32[1,256], index: 4, kind: input, shape index: {}]
  %s5 = inlined_call_operand.hbm [shape: bf16[256,128], index: 5, kind: input, shape index: {}]
  %s6 = inlined_call_operand.vmem [shape: f32[1,128], index: 6, kind: input, shape index: {}]
  %s7 = inlined_call_operand.vmem [shape: f32[32,32], index: 7, kind: input, shape index: {}]
  %s8 = inlined_call_operand.hbm [shape: f32[8,128], index: 8, kind: output, shape index: {0}]
  %s9 = inlined_call_operand.hbm [shape: f32[8,32], index: 9, kind: output, shape index: {1}]
  %s10 = inlined_call_operand.vmem [shape: s32[8,4], index: 10, kind: output, shape index: {2}]
  %s11 = inlined_call_operand.vmem [shape: f32[8,4], index: 11, kind: output, shape index: {3}]
  %12 = xla_tuple %s8, %s9, %s10, %s11
  %s13 = sld [smem:[#allocation0]]
  $region70: #{tpu_custom_call.1} parent=0
    _
  %s15 = ssub.s32 1, %s13
  %s16 = scalar_select 0, %s15, %s13
  $region1: #{tpu_custom_call.1} parent=0
    #allocation2 [shape = 'u8[65536]{0}', space=vmem, size = 0x10000, scoped, tag = 'input window, operand 5, single buffered']
    #allocation3 [shape = 's32[1]{0}', space=sflag, size = 0x4, scoped, tag = 'scoped memory for tpu_custom_call.1']
    #allocation4 [shape = 's32[1]{0}', space=sflag, size = 0x4, scoped, tag = 'scoped memory for tpu_custom_call.1']
    #allocation5 [shape = 'u8[4096]{0}', space=vmem, size = 0x1000, scoped, tag = 'output window, operand 0, single buffered']
    #allocation6 [shape = 'u8[4096]{0}', space=vmem, size = 0x1000, scoped, tag = 'output window, operand 1, single buffered']
    #allocation7 [shape = 's32[1]{0}', space=sflag, size = 0x4, scoped, tag = 'scoped memory for tpu_custom_call.1']
    %17 = vsyncpa [#allocation3], 0
    %18 = vsyncpa [#allocation4], 0
    %19 = vsyncpa [#allocation7], 0
    // Predicated region
    $region2: #{tpu_custom_call.1} parent=1 // pred_check
      _
    $region3: #{tpu_custom_call.1} parent=1 // pred_check_branch
      %21 = sbr.rel (0) target = $region5
    $region4: #{tpu_custom_call.1} parent=1 // pred_region
      _
    $region5: #{tpu_custom_call.1} parent=1 // pred_fallthru
      _
    // Predicated region
    $region6: #{tpu_custom_call.1} parent=1 // pred_check
      _
    $region7: #{tpu_custom_call.1} parent=1 // pred_check_branch
      %23 = sbr.rel (0) target = $region9
    $region8: #{tpu_custom_call.1} parent=1 // pred_region
      _
    $region9: #{tpu_custom_call.1} parent=1 // pred_fallthru
      _
    // Predicated region
    $region10: #{tpu_custom_call.1} parent=1 // pred_check
      _
    $region11: #{tpu_custom_call.1} parent=1 // pred_check_branch
      %25 = sbr.rel (0) target = $region13
    $region12: #{tpu_custom_call.1} parent=1 // pred_region
      _
    $region13: #{tpu_custom_call.1} parent=1 // pred_fallthru
      _
    // Predicated region
    $region14: #{tpu_custom_call.1} parent=1 // pred_check
      _
    $region15: #{tpu_custom_call.1} parent=1 // pred_check_branch
      %27 = sbr.rel (0) target = $region17
    $region16: #{tpu_custom_call.1} parent=1 // pred_region
      _
    $region17: #{tpu_custom_call.1} parent=1 // pred_fallthru
      _
    // Predicated region
    $region18: #{tpu_custom_call.1} parent=1 // pred_check
      _
    $region19: #{tpu_custom_call.1} parent=1 // pred_check_branch
      %29 = sbr.rel (0) target = $region21
    $region20: #{tpu_custom_call.1} parent=1 // pred_region
      _
    $region21: #{tpu_custom_call.1} parent=1 // pred_fallthru
      _
    // Predicated region
    $region22: #{tpu_custom_call.1} parent=1 // pred_check
      _
    $region23: #{tpu_custom_call.1} parent=1 // pred_check_branch
      %31 = sbr.rel (0) target = $region25
    $region24: #{tpu_custom_call.1} parent=1 // pred_region
      %s33 = ssub.s32 2048, 2048
      %34 = vsyncadd [#allocation3], %s33
      %s35 = sshll.u32 [#allocation2], 4
      %s36 = int_to_ptr.vmem [resolvable:$true] %s35
      %41 = dma.hbm_to_vmem [thread:$0]  %s5, 2048, %s36, [#allocation3], 64, 64, 4
    $region25: #{tpu_custom_call.1} parent=1 // pred_fallthru
      _
    // Predicated region
    $region26: #{tpu_custom_call.1} parent=1 // pred_check
      _
    $region27: #{tpu_custom_call.1} parent=1 // pred_check_branch
      %43 = sbr.rel (0) target = $region29
    $region28: #{tpu_custom_call.1} parent=1 // pred_region
      _
    $region29: #{tpu_custom_call.1} parent=1 // pred_fallthru
      _
    // Predicated region
    $region30: #{tpu_custom_call.1} parent=1 // pred_check
      _
    $region31: #{tpu_custom_call.1} parent=1 // pred_check_branch
      %45 = sbr.rel (0) target = $region33
    $region32: #{tpu_custom_call.1} parent=1 // pred_region
      _
    $region33: #{tpu_custom_call.1} parent=1 // pred_fallthru
      _
    // Predicated region
    $region34: #{tpu_custom_call.1} parent=1 // pred_check
      _
    $region35: #{tpu_custom_call.1} parent=1 // pred_check_branch
      %47 = sbr.rel (0) target = $region37
    $region36: #{tpu_custom_call.1} parent=1 // pred_region
      %48 = dma.done [#allocation3], 2048
    $region37: #{tpu_custom_call.1} parent=1 // pred_fallthru
      _
    %v50 = vld [vmem:[%s0] sm:$0xf]
    %v51 = vld [vmem:[%s1] sm:$0xf]
    %v52 = vld [vmem:[%s1 + $0x4] sm:$0xf]
    %v53 = vld [vmem:[%s1 + $0x8] sm:$0xf]
    %v54 = vld [vmem:[%s1 + $0xc] sm:$0xf]
    %v55 = vld [vmem:[%s1 + $0x10] sm:$0xf]
    %v56 = vld [vmem:[%s1 + $0x14] sm:$0xf]
    %v57 = vld [vmem:[%s1 + $0x18] sm:$0xf]
    %v58 = vld [vmem:[%s1 + $0x1c] sm:$0xf]
    %v59 = vld [vmem:[%s1 + $0x20] sm:$0xf]
    %v60 = vld [vmem:[%s1 + $0x24] sm:$0xf]
    %v61 = vld [vmem:[%s1 + $0x28] sm:$0xf]
    %v62 = vld [vmem:[%s1 + $0x2c] sm:$0xf]
    %v63 = vld [vmem:[%s1 + $0x30] sm:$0xf]
    %v64 = vld [vmem:[%s1 + $0x34] sm:$0xf]
    %v65 = vld [vmem:[%s1 + $0x38] sm:$0xf]
    %v66 = vld [vmem:[%s1 + $0x3c] sm:$0xf]
    %v67 = vld [vmem:[%s2] sm:$0x1]
    %v69 = vlaneseq
    %v70 = vshrl.u32 %v69, 7
    %v71 = vsub.s32 0, %v70
    %v72 = vrot.slane %v67, %v71
    %v90 = vunpack.c.l.b16 %v51
    %v91 = vunpack.c.l.b16 %v52
    %v92 = vunpack.c.l.b16 %v53
    %v93 = vunpack.c.l.b16 %v54
    %v94 = vunpack.c.l.b16 %v55
    %v95 = vunpack.c.l.b16 %v56
    %v96 = vunpack.c.l.b16 %v57
    %v97 = vunpack.c.l.b16 %v58
    %v98 = vunpack.c.l.b16 %v59
    %v99 = vunpack.c.l.b16 %v60
    %v100 = vunpack.c.l.b16 %v61
    %v101 = vunpack.c.l.b16 %v62
    %v102 = vunpack.c.l.b16 %v63
    %v103 = vunpack.c.l.b16 %v64
    %v104 = vunpack.c.l.b16 %v65
    %v105 = vunpack.c.l.b16 %v66
    %v106 = vpack.c.b16 %v91, %v90
    %v107 = vpack.c.b16 %v93, %v92
    %v108 = vpack.c.b16 %v95, %v94
    %v109 = vpack.c.b16 %v97, %v96
    %v110 = vpack.c.b16 %v99, %v98
    %v111 = vpack.c.b16 %v101, %v100
    %v112 = vpack.c.b16 %v103, %v102
    %v113 = vpack.c.b16 %v105, %v104
    %122 = vmatprep.subr.bf16.mxu0 0
    %123 = vmatpush1.bf16.msra.mxu0 %v106
    %124 = vmatprep.subr.bf16.mxu0 0
    %125 = vmatpush1.bf16.msra.mxu0 %v107
    %126 = vmatprep.subr.bf16.mxu0 0
    %127 = vmatpush1.bf16.msra.mxu0 %v108
    %128 = vmatprep.subr.bf16.mxu0 0
    %129 = vmatpush1.bf16.msra.mxu0 %v109
    %130 = vmatprep.subr.bf16.mxu0 0
    %131 = vmatpush1.bf16.msra.mxu0 %v110
    %132 = vmatprep.subr.bf16.mxu0 0
    %133 = vmatpush1.bf16.msra.mxu0 %v111
    %134 = vmatprep.subr.bf16.mxu0 0
    %135 = vmatpush1.bf16.msra.mxu0 %v112
    %136 = vmatprep.subr.bf16.mxu0 0
    %137 = vmatpush1.bf16.msra.mxu0 %v113
    %138 = vmatprep.subr.bf16.mxu0 0
    %139 = vmatpush1.bf16.msra.mxu0 0
    %140 = vmatprep.subr.bf16.mxu0 0
    %141 = vmatpush1.bf16.msra.mxu0 0
    %142 = vmatprep.subr.bf16.mxu0 0
    %143 = vmatpush1.bf16.msra.mxu0 0
    %144 = vmatprep.subr.bf16.mxu0 0
    %145 = vmatpush1.bf16.msra.mxu0 0
    %146 = vmatprep.subr.bf16.mxu0 0
    %147 = vmatpush1.bf16.msra.mxu0 0
    %148 = vmatprep.subr.bf16.mxu0 0
    %149 = vmatpush1.bf16.msra.mxu0 0
    %150 = vmatprep.subr.bf16.mxu0 0
    %151 = vmatpush1.bf16.msra.mxu0 0
    %152 = vmatprep.subr.bf16.mxu0 0
    %153 = vmatpush1.bf16.msra.mxu0 0
    %154 = vmatprep.mubr.bf16.mxu0 0
    %155 = vmatmul.mubr.bf16.gmra.mrb[0].mxu0 %v50
    %v156 = vpop.f32.mrb[0].mxu0
    %v157 = vadd.f32 %v72, %v156
    %v158 = vpop.f32.mrb[0].mxu0
    %v159 = vpop.f32.mrb[0].mxu0
    %v160 = vpop.f32.mrb[0].mxu0
    %161 = vdwg.mxu0
    %v162 = vmul.f32 %v157, %v157
    %v163 = vld [vmem:[%s7] sm:$0xff]
    %v164 = vld [vmem:[%s7 + $0x8] sm:$0xff]
    %v165 = vld [vmem:[%s7 + $0x10] sm:$0xff]
    %v166 = vld [vmem:[%s7 + $0x18] sm:$0xff]
    %vm167 = vcmask 261120
    %v169 = vsel %vm167, %v162, 0
    %171 = vmatprep.subr.mxu0 0.0
    %172 = vmatpush1.msra.mxu0 %v163
    %173 = vmatprep.subr.mxu0 0.0
    %174 = vmatpush1.msra.mxu0 %v164
    %175 = vmatprep.subr.mxu0 0.0
    %176 = vmatpush1.msra.mxu0 %v165
    %177 = vmatprep.subr.mxu0 0.0
    %178 = vmatpush1.msra.mxu0 %v166
    %179 = vmatprep.subr.mxu0 0.0
    %180 = vmatpush1.msra.mxu0 0.0
    %181 = vmatprep.subr.mxu0 0.0
    %182 = vmatpush1.msra.mxu0 0.0
    %183 = vmatprep.subr.mxu0 0.0
    %184 = vmatpush1.msra.mxu0 0.0
    %185 = vmatprep.subr.mxu0 0.0
    %186 = vmatpush1.msra.mxu0 0.0
    %187 = vmatprep.subr.mxu0 0.0
    %188 = vmatpush1.msra.mxu0 0.0
    %189 = vmatprep.subr.mxu0 0.0
    %190 = vmatpush1.msra.mxu0 0.0
    %191 = vmatprep.subr.mxu0 0.0
    %192 = vmatpush1.msra.mxu0 0.0
    %193 = vmatprep.subr.mxu0 0.0
    %194 = vmatpush1.msra.mxu0 0.0
    %195 = vmatprep.subr.mxu0 0.0
    %196 = vmatpush1.msra.mxu0 0.0
    %197 = vmatprep.subr.mxu0 0.0
    %198 = vmatpush1.msra.mxu0 0.0
    %199 = vmatprep.subr.mxu0 0.0
    %200 = vmatpush1.msra.mxu0 0.0
    %201 = vmatprep.subr.mxu0 0.0
    %202 = vmatpush1.msra.mxu0 0.0
    %203 = vmatprep.subr.mxu0 0.0
    %204 = vmatpush1.msra.mxu0 0.0
    %205 = vmatprep.subr.mxu0 0.0
    %206 = vmatpush1.msra.mxu0 0.0
    %207 = vmatprep.subr.mxu0 0.0
    %208 = vmatpush1.msra.mxu0 0.0
    %209 = vmatprep.subr.mxu0 0.0
    %210 = vmatpush1.msra.mxu0 0.0
    %211 = vmatprep.subr.mxu0 0.0
    %212 = vmatpush1.msra.mxu0 0.0
    %213 = vmatprep.subr.mxu0 0.0
    %214 = vmatpush1.msra.mxu0 0.0
    %215 = vmatprep.subr.mxu0 0.0
    %216 = vmatpush1.msra.mxu0 0.0
    %217 = vmatprep.subr.mxu0 0.0
    %218 = vmatpush1.msra.mxu0 0.0
    %219 = vmatprep.subr.mxu0 0.0
    %220 = vmatpush1.msra.mxu0 0.0
    %221 = vmatprep.subr.mxu0 0.0
    %222 = vmatpush1.msra.mxu0 0.0
    %223 = vmatprep.subr.mxu0 0.0
    %224 = vmatpush1.msra.mxu0 0.0
    %225 = vmatprep.subr.mxu0 0.0
    %226 = vmatpush1.msra.mxu0 0.0
    %227 = vmatprep.subr.mxu0 0.0
    %228 = vmatpush1.msra.mxu0 0.0
    %229 = vmatprep.subr.mxu0 0.0
    %230 = vmatpush1.msra.mxu0 0.0
    %231 = vmatprep.subr.mxu0 0.0
    %232 = vmatpush1.msra.mxu0 0.0
    %233 = vmatprep.subr.mxu0 0.0
    %234 = vmatpush1.msra.mxu0 0.0
    %235 = vmatprep.mubr.f32.mxu0 0.0
    %236 = vmatmul.mubr.f32.gmra.mrb[0].mxu0 %v169
    %v237 = vpop.f32.mrb[0].mxu0
    %v238 = vadd.f32 0.0, %v237
    %v239 = vpop.f32.mrb[0].mxu0
    %240 = vdwg.mxu0
    %v241 = vmax.f32 %v238, 1e-24
    %v242 = vrsqrt.pop %v241
    %v243 = vmul.f32 %v157, %v242
    %v244 = vpack.c.bf16 %v243, %v243
    %v245 = vld [vmem:[%s3] sm:$0xff]
    %v246 = vld [vmem:[%s3 + $0x8] sm:$0xff]
    %v247 = vld [vmem:[%s3 + $0x10] sm:$0xff]
    %v248 = vld [vmem:[%s3 + $0x18] sm:$0xff]
    %v253 = vunpack.c.l.b16 %v245
    %v254 = vunpack.c.h.b16 %v245
    %v255 = vunpack.c.l.b16 %v246
    %v256 = vunpack.c.h.b16 %v246
    %v257 = vunpack.c.l.b16 %v247
    %v258 = vunpack.c.h.b16 %v247
    %v259 = vunpack.c.l.b16 %v248
    %v260 = vunpack.c.h.b16 %v248
    %v261 = vpack.c.b16 %v255, %v253
    %v262 = vpack.c.b16 %v256, %v254
    %v263 = vpack.c.b16 %v259, %v257
    %v264 = vpack.c.b16 %v260, %v258
    %v270 = vsel %vm167, %v244, 0
    %272 = vmatprep.subr.bf16.mxu0 %v262
    %273 = vmatpush1.bf16.msra.mxu0 %v261
    %274 = vmatprep.subr.bf16.mxu0 %v264
    %275 = vmatpush1.bf16.msra.mxu0 %v263
    %276 = vmatprep.subr.bf16.mxu0 0
    %277 = vmatpush1.bf16.msra.mxu0 0
    %278 = vmatprep.subr.bf16.mxu0 0
    %279 = vmatpush1.bf16.msra.mxu0 0
    %280 = vmatprep.subr.bf16.mxu0 0
    %281 = vmatpush1.bf16.msra.mxu0 0
    %282 = vmatprep.subr.bf16.mxu0 0
    %283 = vmatpush1.bf16.msra.mxu0 0
    %284 = vmatprep.subr.bf16.mxu0 0
    %285 = vmatpush1.bf16.msra.mxu0 0
    %286 = vmatprep.subr.bf16.mxu0 0
    %287 = vmatpush1.bf16.msra.mxu0 0
    %288 = vmatprep.subr.bf16.mxu0 0
    %289 = vmatpush1.bf16.msra.mxu0 0
    %290 = vmatprep.subr.bf16.mxu0 0
    %291 = vmatpush1.bf16.msra.mxu0 0
    %292 = vmatprep.subr.bf16.mxu0 0
    %293 = vmatpush1.bf16.msra.mxu0 0
    %294 = vmatprep.subr.bf16.mxu0 0
    %295 = vmatpush1.bf16.msra.mxu0 0
    %296 = vmatprep.subr.bf16.mxu0 0
    %297 = vmatpush1.bf16.msra.mxu0 0
    %298 = vmatprep.subr.bf16.mxu0 0
    %299 = vmatpush1.bf16.msra.mxu0 0
    %300 = vmatprep.subr.bf16.mxu0 0
    %301 = vmatpush1.bf16.msra.mxu0 0
    %302 = vmatprep.subr.bf16.mxu0 0
    %303 = vmatpush1.bf16.msra.mxu0 0
    %304 = vmatprep.mubr.bf16.mxu0 0
    %305 = vmatmul.mubr.bf16.gmra.mrb[0].mxu0 %v270
    %v306 = vpop.f32.mrb[0].mxu0
    %v307 = vadd.f32 0.0, %v306
    %v308 = vpop.f32.mrb[0].mxu0
    %v309 = vadd.f32 0.0, %v308
    %v310 = vpop.f32.mrb[0].mxu0
    %v311 = vpop.f32.mrb[0].mxu0
    %312 = vdwg.mxu0
    %v313 = vlaneseq
    %v314 = vand.u32 %v313, 127
    %v315 = vadd.s32 %v314, 128
    %vm316 = vcmp.ge.s32.totalorder %v314, 0
    %vm317 = vcmp.ge.s32.totalorder %v315, 0
    %vm318 = vcmp.lt.s32.totalorder %v314, 64
    %vm319 = vcmp.lt.s32.totalorder %v315, 64
    %vm320 = vmand %vm316, %vm318
    %vm321 = vmand %vm317, %vm319
    %v322 = vsel %vm320, %v307, -3e+38
    %v323 = vsel %vm321, %v309, -3e+38
    %v324 = vmax.f32 %v322, %v323
    %325 = vmax.xlane.f32.xlu0 %v324
    %v326 = vpop.xlane.xlu0 %325
    %vm327 = vcmp.ge.f32.partialorder %v322, %v326
    %vm328 = vcmp.ge.f32.partialorder %v323, %v326
    %v329 = vsel %vm327, %v314, 64
    %v330 = vsel %vm328, %v315, 64
    %vm331 = vcmp.lt.s32.totalorder %v329, %v330
    %v332 = vsel %vm331, %v329, %v330
    %v333 = vand.u32 %v332, 65535
    %v334 = vshra.s32 %v332, 16
    %v335 = vcvt.s32.f32 %v333
    %v336 = vcvt.s32.f32 %v334
    %337 = vmin.xlane.f32.xlu0 %v336
    %v338 = vpop.xlane.xlu0 %337
    %vm339 = vcmp.eq.f32.partialorder %v336, %v338
    %v340 = vsel %vm339, %v335, inf
    %341 = vmin.xlane.f32.xlu0 %v340
    %v342 = vpop.xlane.xlu0 %341
    %v343 = vcvt.f32.s32 %v342
    %v344 = vcvt.f32.s32 %v338
    %v345 = vshll.u32 %v344, 16
    %v346 = vadd.s32 %v345, %v343
    %vm347 = vcmp.eq.s32.totalorder %v314, %v346
    %vm348 = vcmp.eq.s32.totalorder %v315, %v346
    %vm349 = vmand %vm320, %vm347
    %vm350 = vmand %vm321, %vm348
    %v351 = vsel %vm349, 1.0, 0.0
    %v352 = vsel %vm350, 1.0, 0.0
    %v353 = vadd.f32 %v351, 0.0
    %v354 = vadd.f32 %v352, 0.0
    %vm355 = vcmp.ge.s32.totalorder %v314, 64
    %vm356 = vcmp.ge.s32.totalorder %v315, 64
    %vm357 = vcmp.lt.s32.totalorder %v314, 128
    %vm358 = vcmp.lt.s32.totalorder %v315, 128
    %vm359 = vmand %vm355, %vm357
    %vm360 = vmand %vm356, %vm358
    %v361 = vsel %vm359, %v307, -3e+38
    %v362 = vsel %vm360, %v309, -3e+38
    %v363 = vmax.f32 %v361, %v362
    %364 = vmax.xlane.f32.xlu0 %v363
    %v365 = vpop.xlane.xlu0 %364
    %v366 = vsub.s32 %v314, 64
    %v367 = vsub.s32 %v315, 64
    %vm368 = vcmp.ge.f32.partialorder %v361, %v365
    %vm369 = vcmp.ge.f32.partialorder %v362, %v365
    %v370 = vsel %vm368, %v366, 64
    %v371 = vsel %vm369, %v367, 64
    %vm372 = vcmp.lt.s32.totalorder %v370, %v371
    %v373 = vsel %vm372, %v370, %v371
    %v374 = vand.u32 %v373, 65535
    %v375 = vshra.s32 %v373, 16
    %v376 = vcvt.s32.f32 %v374
    %v377 = vcvt.s32.f32 %v375
    %378 = vmin.xlane.f32.xlu0 %v377
    %v379 = vpop.xlane.xlu0 %378
    %vm380 = vcmp.eq.f32.partialorder %v377, %v379
    %v381 = vsel %vm380, %v376, inf
    %382 = vmin.xlane.f32.xlu0 %v381
    %v383 = vpop.xlane.xlu0 %382
    %v384 = vcvt.f32.s32 %v383
    %v385 = vcvt.f32.s32 %v379
    %v386 = vshll.u32 %v385, 16
    %v387 = vadd.s32 %v386, %v384
    %vm388 = vcmp.eq.s32.totalorder %v366, %v387
    %vm389 = vcmp.eq.s32.totalorder %v367, %v387
    %vm390 = vmand %vm359, %vm388
    %vm391 = vmand %vm360, %vm389
    %v392 = vsel %vm390, 1.0, 0.0
    %v393 = vsel %vm391, 1.0, 0.0
    %v394 = vadd.f32 %v353, %v392
    %v395 = vadd.f32 %v354, %v393
    %vm396 = vcmp.ge.s32.totalorder %v314, 128
    %vm397 = vcmp.ge.s32.totalorder %v315, 128
    %vm398 = vcmp.lt.s32.totalorder %v314, 192
    %vm399 = vcmp.lt.s32.totalorder %v315, 192
    %vm400 = vmand %vm396, %vm398
    %vm401 = vmand %vm397, %vm399
    %v402 = vsel %vm400, %v307, -3e+38
    %v403 = vsel %vm401, %v309, -3e+38
    %v404 = vmax.f32 %v402, %v403
    %405 = vmax.xlane.f32.xlu0 %v404
    %v406 = vpop.xlane.xlu0 %405
    %v407 = vsub.s32 %v314, 128
    %vm408 = vcmp.ge.f32.partialorder %v402, %v406
    %vm409 = vcmp.ge.f32.partialorder %v403, %v406
    %v410 = vsel %vm408, %v407, 64
    %v411 = vsel %vm409, %v314, 64
    %vm412 = vcmp.lt.s32.totalorder %v410, %v411
    %v413 = vsel %vm412, %v410, %v411
    %v414 = vand.u32 %v413, 65535
    %v415 = vshra.s32 %v413, 16
    %v416 = vcvt.s32.f32 %v414
    %v417 = vcvt.s32.f32 %v415
    %418 = vmin.xlane.f32.xlu0 %v417
    %v419 = vpop.xlane.xlu0 %418
    %vm420 = vcmp.eq.f32.partialorder %v417, %v419
    %v421 = vsel %vm420, %v416, inf
    %422 = vmin.xlane.f32.xlu0 %v421
    %v423 = vpop.xlane.xlu0 %422
    %v424 = vcvt.f32.s32 %v423
    %v425 = vcvt.f32.s32 %v419
    %v426 = vshll.u32 %v425, 16
    %v427 = vadd.s32 %v426, %v424
    %vm428 = vcmp.eq.s32.totalorder %v407, %v427
    %vm429 = vcmp.eq.s32.totalorder %v314, %v427
    %vm430 = vmand %vm400, %vm428
    %vm431 = vmand %vm401, %vm429
    %v432 = vsel %vm430, 1.0, 0.0
    %v433 = vsel %vm431, 1.0, 0.0
    %v434 = vadd.f32 %v394, %v432
    %v435 = vadd.f32 %v395, %v433
    %vm436 = vcmp.ge.s32.totalorder %v314, 192
    %vm437 = vcmp.ge.s32.totalorder %v315, 192
    %vm438 = vcmp.lt.s32.totalorder %v314, 256
    %vm439 = vcmp.lt.s32.totalorder %v315, 256
    %vm440 = vmand %vm436, %vm438
    %vm441 = vmand %vm437, %vm439
    %v442 = vsel %vm440, %v307, -3e+38
    %v443 = vsel %vm441, %v309, -3e+38
    %v444 = vmax.f32 %v442, %v443
    %445 = vmax.xlane.f32.xlu0 %v444
    %v446 = vpop.xlane.xlu0 %445
    %v447 = vsub.s32 %v314, 192
    %v448 = vsub.s32 %v315, 192
    %vm449 = vcmp.ge.f32.partialorder %v442, %v446
    %vm450 = vcmp.ge.f32.partialorder %v443, %v446
    %v451 = vsel %vm449, %v447, 64
    %v452 = vsel %vm450, %v448, 64
    %vm453 = vcmp.lt.s32.totalorder %v451, %v452
    %v454 = vsel %vm453, %v451, %v452
    %v455 = vand.u32 %v454, 65535
    %v456 = vshra.s32 %v454, 16
    %v457 = vcvt.s32.f32 %v455
    %v458 = vcvt.s32.f32 %v456
    %459 = vmin.xlane.f32.xlu0 %v458
    %v460 = vpop.xlane.xlu0 %459
    %vm461 = vcmp.eq.f32.partialorder %v458, %v460
    %v462 = vsel %vm461, %v457, inf
    %463 = vmin.xlane.f32.xlu0 %v462
    %v464 = vpop.xlane.xlu0 %463
    %v465 = vcvt.f32.s32 %v464
    %v466 = vcvt.f32.s32 %v460
    %v467 = vshll.u32 %v466, 16
    %v468 = vadd.s32 %v467, %v465
    %vm469 = vcmp.eq.s32.totalorder %v447, %v468
    %vm470 = vcmp.eq.s32.totalorder %v448, %v468
    %vm471 = vmand %vm440, %vm469
    %vm472 = vmand %vm441, %vm470
    %v473 = vsel %vm471, 1.0, 0.0
    %v474 = vsel %vm472, 1.0, 0.0
    %v475 = vadd.f32 %v434, %v473
    %v476 = vadd.f32 %v435, %v474
    %vm477 = vcmask 7168
    %v478 = vsel %vm477, %v346, %v387
    %vm479 = vcmask 15360
    %v480 = vsel %vm479, %v478, %v427
    %vm481 = vcmask 23552
    %v482 = vsel %vm481, %v480, %v468
    %v483 = vsel %vm477, %v326, %v365
    %v484 = vsel %vm479, %v483, %v406
    %v485 = vsel %vm481, %v484, %v446
    %v486 = vpack.c.bf16 %v475, %v475
    %v487 = vpack.c.bf16 %v476, %v476
    %v488 = vld [vmem:[#allocation2] sm:$0xf]
    %v489 = vld [vmem:[#allocation2 + $0x4] sm:$0xf]
    %v490 = vld [vmem:[#allocation2 + $0x8] sm:$0xf]
    %v491 = vld [vmem:[#allocation2 + $0xc] sm:$0xf]
    %v492 = vld [vmem:[#allocation2 + $0x10] sm:$0xf]
    %v493 = vld [vmem:[#allocation2 + $0x14] sm:$0xf]
    %v494 = vld [vmem:[#allocation2 + $0x18] sm:$0xf]
    %v495 = vld [vmem:[#allocation2 + $0x1c] sm:$0xf]
    %v496 = vld [vmem:[#allocation2 + $0x20] sm:$0xf]
    %v497 = vld [vmem:[#allocation2 + $0x24] sm:$0xf]
    %v498 = vld [vmem:[#allocation2 + $0x28] sm:$0xf]
    %v499 = vld [vmem:[#allocation2 + $0x2c] sm:$0xf]
    %v500 = vld [vmem:[#allocation2 + $0x30] sm:$0xf]
    %v501 = vld [vmem:[#allocation2 + $0x34] sm:$0xf]
    %v502 = vld [vmem:[#allocation2 + $0x38] sm:$0xf]
    %v503 = vld [vmem:[#allocation2 + $0x3c] sm:$0xf]
    %v504 = vld [vmem:[#allocation2 + $0x40] sm:$0xf]
    %v505 = vld [vmem:[#allocation2 + $0x44] sm:$0xf]
    %v506 = vld [vmem:[#allocation2 + $0x48] sm:$0xf]
    %v507 = vld [vmem:[#allocation2 + $0x4c] sm:$0xf]
    %v508 = vld [vmem:[#allocation2 + $0x50] sm:$0xf]
    %v509 = vld [vmem:[#allocation2 + $0x54] sm:$0xf]
    %v510 = vld [vmem:[#allocation2 + $0x58] sm:$0xf]
    %v511 = vld [vmem:[#allocation2 + $0x5c] sm:$0xf]
    %v512 = vld [vmem:[#allocation2 + $0x60] sm:$0xf]
    %v513 = vld [vmem:[#allocation2 + $0x64] sm:$0xf]
    %v514 = vld [vmem:[#allocation2 + $0x68] sm:$0xf]
    %v515 = vld [vmem:[#allocation2 + $0x6c] sm:$0xf]
    %v516 = vld [vmem:[#allocation2 + $0x70] sm:$0xf]
    %v517 = vld [vmem:[#allocation2 + $0x74] sm:$0xf]
    %v518 = vld [vmem:[#allocation2 + $0x78] sm:$0xf]
    %v519 = vld [vmem:[#allocation2 + $0x7c] sm:$0xf]
    %v520 = vld [vmem:[%s6] sm:$0x1]
    %v522 = vlaneseq
    %v523 = vshrl.u32 %v522, 7
    %v524 = vsub.s32 0, %v523
    %v525 = vrot.slane %v520, %v524
    %v559 = vunpack.c.l.b16 %v488
    %v560 = vunpack.c.l.b16 %v489
    %v561 = vunpack.c.l.b16 %v490
    %v562 = vunpack.c.l.b16 %v491
    %v563 = vunpack.c.l.b16 %v492
    %v564 = vunpack.c.l.b16 %v493
    %v565 = vunpack.c.l.b16 %v494
    %v566 = vunpack.c.l.b16 %v495
    %v567 = vunpack.c.l.b16 %v496
    %v568 = vunpack.c.l.b16 %v497
    %v569 = vunpack.c.l.b16 %v498
    %v570 = vunpack.c.l.b16 %v499
    %v571 = vunpack.c.l.b16 %v500
    %v572 = vunpack.c.l.b16 %v501
    %v573 = vunpack.c.l.b16 %v502
    %v574 = vunpack.c.l.b16 %v503
    %v575 = vunpack.c.l.b16 %v504
    %v576 = vunpack.c.l.b16 %v505
    %v577 = vunpack.c.l.b16 %v506
    %v578 = vunpack.c.l.b16 %v507
    %v579 = vunpack.c.l.b16 %v508
    %v580 = vunpack.c.l.b16 %v509
    %v581 = vunpack.c.l.b16 %v510
    %v582 = vunpack.c.l.b16 %v511
    %v583 = vunpack.c.l.b16 %v512
    %v584 = vunpack.c.l.b16 %v513
    %v585 = vunpack.c.l.b16 %v514
    %v586 = vunpack.c.l.b16 %v515
    %v587 = vunpack.c.l.b16 %v516
    %v588 = vunpack.c.l.b16 %v517
    %v589 = vunpack.c.l.b16 %v518
    %v590 = vunpack.c.l.b16 %v519
    %v591 = vpack.c.b16 %v560, %v559
    %v592 = vpack.c.b16 %v562, %v561
    %v593 = vpack.c.b16 %v564, %v563
    %v594 = vpack.c.b16 %v566, %v565
    %v595 = vpack.c.b16 %v568, %v567
    %v596 = vpack.c.b16 %v570, %v569
    %v597 = vpack.c.b16 %v572, %v571
    %v598 = vpack.c.b16 %v574, %v573
    %v599 = vpack.c.b16 %v576, %v575
    %v600 = vpack.c.b16 %v578, %v577
    %v601 = vpack.c.b16 %v580, %v579
    %v602 = vpack.c.b16 %v582, %v581
    %v603 = vpack.c.b16 %v584, %v583
    %v604 = vpack.c.b16 %v586, %v585
    %v605 = vpack.c.b16 %v588, %v587
    %v606 = vpack.c.b16 %v590, %v589
    %623 = vmatprep.subr.bf16.mxu0 0
    %624 = vmatpush1.bf16.msra.mxu0 %v591
    %625 = vmatprep.subr.bf16.mxu0 0
    %626 = vmatpush1.bf16.msra.mxu0 %v592
    %627 = vmatprep.subr.bf16.mxu0 0
    %628 = vmatpush1.bf16.msra.mxu0 %v593
    %629 = vmatprep.subr.bf16.mxu0 0
    %630 = vmatpush1.bf16.msra.mxu0 %v594
    %631 = vmatprep.subr.bf16.mxu0 0
    %632 = vmatpush1.bf16.msra.mxu0 %v595
    %633 = vmatprep.subr.bf16.mxu0 0
    %634 = vmatpush1.bf16.msra.mxu0 %v596
    %635 = vmatprep.subr.bf16.mxu0 0
    %636 = vmatpush1.bf16.msra.mxu0 %v597
    %637 = vmatprep.subr.bf16.mxu0 0
    %638 = vmatpush1.bf16.msra.mxu0 %v598
    %639 = vmatprep.subr.bf16.mxu0 0
    %640 = vmatpush1.bf16.msra.mxu0 %v599
    %641 = vmatprep.subr.bf16.mxu0 0
    %642 = vmatpush1.bf16.msra.mxu0 %v600
    %643 = vmatprep.subr.bf16.mxu0 0
    %644 = vmatpush1.bf16.msra.mxu0 %v601
    %645 = vmatprep.subr.bf16.mxu0 0
    %646 = vmatpush1.bf16.msra.mxu0 %v602
    %647 = vmatprep.subr.bf16.mxu0 0
    %648 = vmatpush1.bf16.msra.mxu0 %v603
    %649 = vmatprep.subr.bf16.mxu0 0
    %650 = vmatpush1.bf16.msra.mxu0 %v604
    %651 = vmatprep.subr.bf16.mxu0 0
    %652 = vmatpush1.bf16.msra.mxu0 %v605
    %653 = vmatprep.subr.bf16.mxu0 0
    %654 = vmatpush1.bf16.msra.mxu0 %v606
    %655 = vmatprep.mubr.bf16.mxu0 %v487
    %656 = vmatmul.mubr.bf16.gmra.mrb[0].mxu0 %v486
    %v657 = vpop.f32.mrb[0].mxu0
    %v658 = vadd.f32 %v525, %v657
    %v659 = vpop.f32.mrb[0].mxu0
    %v660 = vpop.f32.mrb[0].mxu0
    %v661 = vpop.f32.mrb[0].mxu0
    %662 = vdwg.mxu0
    %v663 = vsub.f32 2.0, %v485
    %v664 = vmax.f32 %v663, 0.0
    %665 = vst [vmem:[#allocation5] sm:$0xff] %v658
    %666 = vst.msk [vmem:[#allocation6] sm:$0xff] %vm167, %v243
    %vm667 = vcmask 31744
    %668 = vst.msk [vmem:[%s10] sm:$0xff] %vm667, %v482
    %669 = vst.msk [vmem:[%s11] sm:$0xff] %vm667, %v664
    // Predicated region
    $region38: #{tpu_custom_call.1} parent=1 // pred_check
      _
    $region39: #{tpu_custom_call.1} parent=1 // pred_check_branch
      %671 = sbr.rel (0) target = $region41
    $region40: #{tpu_custom_call.1} parent=1 // pred_region
      %s673 = ssub.s32 128, 128
      %674 = vsyncadd [#allocation4], %s673
      %s676 = sshll.u32 [#allocation5], 4
      %s677 = int_to_ptr.vmem [resolvable:$true] %s676
      %679 = dma.vmem_to_hbm [thread:$0]  %s677, 128, %s8, [#allocation4]
    $region41: #{tpu_custom_call.1} parent=1 // pred_fallthru
      _
    // Predicated region
    $region42: #{tpu_custom_call.1} parent=1 // pred_check
      _
    $region43: #{tpu_custom_call.1} parent=1 // pred_check_branch
      %681 = sbr.rel (0) target = $region45
    $region44: #{tpu_custom_call.1} parent=1 // pred_region
      %s683 = ssub.s32 128, 128
      %684 = vsyncadd [#allocation7], %s683
      %s686 = sshll.u32 [#allocation6], 4
      %s687 = int_to_ptr.vmem [resolvable:$true] %s686
      %689 = dma.vmem_to_hbm [thread:$0]  %s687, 128, %s9, [#allocation7]
    $region45: #{tpu_custom_call.1} parent=1 // pred_fallthru
      _
    // Predicated region
    $region46: #{tpu_custom_call.1} parent=1 // pred_check
      _
    $region47: #{tpu_custom_call.1} parent=1 // pred_check_branch
      %691 = sbr.rel (0) target = $region49
    $region48: #{tpu_custom_call.1} parent=1 // pred_region
      _
    $region49: #{tpu_custom_call.1} parent=1 // pred_fallthru
      _
    // Predicated region
    $region50: #{tpu_custom_call.1} parent=1 // pred_check
      _
    $region51: #{tpu_custom_call.1} parent=1 // pred_check_branch
      %693 = sbr.rel (0) target = $region53
    $region52: #{tpu_custom_call.1} parent=1 // pred_region
      _
    $region53: #{tpu_custom_call.1} parent=1 // pred_fallthru
      _
    // Predicated region
    $region54: #{tpu_custom_call.1} parent=1 // pred_check
      _
    $region55: #{tpu_custom_call.1} parent=1 // pred_check_branch
      %695 = sbr.rel (0) target = $region57
    $region56: #{tpu_custom_call.1} parent=1 // pred_region
      %696 = dma.done [#allocation4], 128
    $region57: #{tpu_custom_call.1} parent=1 // pred_fallthru
      _
    // Predicated region
    $region58: #{tpu_custom_call.1} parent=1 // pred_check
      _
    $region59: #{tpu_custom_call.1} parent=1 // pred_check_branch
      %698 = sbr.rel (0) target = $region61
    $region60: #{tpu_custom_call.1} parent=1 // pred_region
      %699 = dma.done [#allocation7], 128
    $region61: #{tpu_custom_call.1} parent=1 // pred_fallthru
      _
    // Predicated region
    $region62: #{tpu_custom_call.1} parent=1 // pred_check
      _
    $region63: #{tpu_custom_call.1} parent=1 // pred_check_branch
      %701 = sbr.rel (0) target = $region65
    $region64: #{tpu_custom_call.1} parent=1 // pred_region
      _
    $region65: #{tpu_custom_call.1} parent=1 // pred_fallthru
      _
    // Predicated region
    $region66: #{tpu_custom_call.1} parent=1 // pred_check
      _
    $region67: #{tpu_custom_call.1} parent=1 // pred_check_branch
      %703 = sbr.rel (0) target = $region69
    $region68: #{tpu_custom_call.1} parent=1 // pred_region
      _
    $region69: #{tpu_custom_call.1} parent=1 // pred_fallthru
      _
    %704 = vsyncpa [#allocation3], 1
    %705 = vsyncpa [#allocation4], 1
    %706 = vsyncpa [#allocation7], 1

</llo_original>
